<compile_context>
chip_gen: v6e
topology: v6e:2x2x1
jax: 0.10.0
libtpu: 0.0.40
codegen_flags: <defaults>
</compile_context>

<pallas_src>
import jax
import jax.numpy as jnp
from jax.experimental import pallas as pl
from jax.experimental.pallas import tpu as pltpu


def make_cnn_nli_kernel(tb, seq, window, channels, vocab, hidden, out_dim):
    L = seq - window + 1
    C2 = 2 * channels
    n = 2 * tb * seq

    def kernel(ids_ref, tconv_ref, bc_ref, wf_ref, bf1_ref, bf2_ref,
               wh1_ref, bh1_ref, wh2_ref, bh2_ref, out_ref):
        # ids tile: (1, 2*tb*seq, 1) -> (n, 1); rows ordered (branch, batch, seq)
        ids = ids_ref[0]

        # ---- fused embedding gather + conv: onehot @ (embedding @ wc_all) ----
        # One-hot matmul is an exact gather (one nonzero per row) and rides the
        # MXU; T already folds the conv weights, so this is the ONLY matmul
        # over the big dimension. padding_idx=0 is preserved (emb row 0 == 0
        # => T row 0 == 0).
        # TODO(synk): for large vocabularies (one-hot tile beyond a few MB)
        # switch to a scalar-prefetch / DMA row gather from an HBM-resident T
        # (memory_space=pl.ANY) instead of the one-hot path.
        onehot = (jax.lax.broadcasted_iota(jnp.int32, (n, vocab), 1)
                  == ids).astype(jnp.float32)                              # (n, V)
        p = jnp.dot(onehot, tconv_ref[...],
                    preferred_element_type=jnp.float32)                    # (n, W*2C)

        # Conv2d(1->C, kernel=(W,E)) for BOTH branches = W shifted VPU adds of p.
        # NOTE: layout-free reshape only because seq is a multiple of 8.
        p = p.reshape(2 * tb, seq, window * C2)
        fm = p[:, 0:L, 0:C2]
        for t in range(1, window):                                         # static W
            fm = fm + p[:, t:t + L, t * C2:(t + 1) * C2]                   # (2tb, L, 2C)

        # max_pool1d over L, then bias + ReLU. Valid reorder: bias is constant
        # over L and ReLU is monotone, so relu(max_l(x)+b) == max_l(relu(x+b)).
        # (No padded rows: the L-slices above cover exactly the valid windows.)
        pooled = jnp.maximum(jnp.max(fm, axis=1) + bc_ref[...], 0.0)       # (2tb, 2C)

        # TODO(synk): nn.Dropout is identity at inference; no random mask here.

        # Per-branch Linear(C -> 1), fused: mask the irrelevant lane half per
        # row block and do a single lane reduce over the resident layout.
        row = jax.lax.broadcasted_iota(jnp.int32, (2 * tb, C2), 0)
        lane = jax.lax.broadcasted_iota(jnp.int32, (2 * tb, C2), 1)
        keep = (row < tb) == (lane < channels)       # x1 rows use wf1 lanes, x2 rows wf2 lanes
        red = jnp.sum(jnp.where(keep, pooled * wf_ref[...], 0.0),
                      axis=-1, keepdims=True)                              # (2tb, 1)
        o1 = red[:tb] + bf1_ref[...]                                       # (tb, 1)
        o2 = red[tb:] + bf2_ref[...]                                       # (tb, 1)

        # fc1(4 -> H): cat([o1,o2,o1*o2,o1-o2]) @ W1 as 4 rank-1 VPU updates.
        w1 = wh1_ref[...]                                                  # (4, H)
        h = (o1 * w1[0:1, :] + o2 * w1[1:2, :]
             + (o1 * o2) * w1[2:3, :] + (o1 - o2) * w1[3:4, :]) + bh1_ref[...]
        h = jnp.maximum(h, 0.0)                                            # (tb, H)

        # fc2(H -> O): one tiny MXU matmul (MXU idle here; avoids XLU reduces
        # and narrow lane-concat stores).
        out_ref[...] = (jnp.dot(h, wh2_ref[...],
                                preferred_element_type=jnp.float32)
                        + bh2_ref[...])                                    # (tb, O)

    return kernel


def cnn_nli_forward(x1, x2, params, window):
    B, S = x1.shape
    V, E = params['embedding'].shape
    C = params['wc1'].shape[1]
    H = params['wh1'].shape[1]
    O = params['wh2'].shape[1]
    W = window
    C2 = 2 * C

    # Pack both branches' conv weights lane-dense: (E, W*2C),
    # lane block t = [wc1[t*E:(t+1)*E, :] | wc2[t*E:(t+1)*E, :]], then fold the
    # embedding table in: T = embedding @ wc_all  (parameters only, done once).
    wc1 = params['wc1'].reshape(W, E, C)
    wc2 = params['wc2'].reshape(W, E, C)
    wc_all = jnp.transpose(jnp.concatenate([wc1, wc2], axis=2), (1, 0, 2))
    wc_all = wc_all.reshape(E, W * C2)                                     # (E, W*2C)
    t_conv = jnp.dot(params['embedding'], wc_all)                          # (V, W*2C)
    bc_cat = jnp.concatenate([params['bc1'], params['bc2']], axis=1)       # (1, 2C)
    wf_cat = jnp.concatenate([params['wf1'], params['wf2']], axis=1)       # (1, 2C)

    # Batch tiling: hard cap at 64 rows per step; pad B up to a multiple of TB
    # (padding tokens use padding_idx=0 and are sliced off the output). Large B
    # therefore yields >= 2 "parallel" grid steps (v7x megacore sharding).
    TB = min(B, 64)
    G = pl.cdiv(B, TB)
    Bp = G * TB

    # One-hot gather path only for small vocab / tile (v7x has 64 MiB VMEM).
    assert 2 * TB * S * V * 4 <= 8 * 1024 * 1024, \
        "vocab too large for the one-hot gather path; use a DMA gather"

    def pad_ids(x):
        xi = jnp.clip(x.astype(jnp.int32), 0, V - 1)
        if Bp != B:
            xi = jnp.concatenate(
                [xi, jnp.zeros((Bp - B, S), jnp.int32)], axis=0)
        return xi.reshape(G, TB, S)

    # Per-tile-contiguous id layout: (G, 2*TB*S, 1), rows = (branch, batch, seq).
    ids_all = jnp.concatenate([pad_ids(x1), pad_ids(x2)],
                              axis=1).reshape(G, 2 * TB * S, 1)

    fixed = lambda i: (0, 0)    # weights stay resident across grid steps

    in_specs = [
        pl.BlockSpec((1, 2 * TB * S, 1), lambda i: (i, 0, 0)),  # ids (both branches)
        pl.BlockSpec((V, W * C2), fixed),                       # fused emb@conv table
        pl.BlockSpec((1, C2), fixed),                           # packed conv biases
        pl.BlockSpec((1, C2), fixed),                           # packed wf1|wf2
        pl.BlockSpec((1, 1), fixed),                            # bf1
        pl.BlockSpec((1, 1), fixed),                            # bf2
        pl.BlockSpec((4, H), fixed),                            # wh1
        pl.BlockSpec((1, H), fixed),                            # bh1
        pl.BlockSpec((H, O), fixed),                            # wh2
        pl.BlockSpec((1, O), fixed),                            # bh2
    ]

    kernel = make_cnn_nli_kernel(TB, S, W, C, V, H, O)
    out = pl.pallas_call(
        kernel,
        out_shape=jax.ShapeDtypeStruct((Bp, O), jnp.float32),
        grid=(G,),
        in_specs=in_specs,
        out_specs=pl.BlockSpec((TB, O), lambda i: (i, 0)),
        compiler_params=pltpu.CompilerParams(
            dimension_semantics=("parallel",),
            vmem_limit_bytes=32 * 1024 * 1024),
    )(ids_all, t_conv, bc_cat, wf_cat,
      params['bf1'], params['bf2'],
      params['wh1'], params['bh1'], params['wh2'], params['bh2'])

    return out[:B] if Bp != B else out


# ---------------------------- pure-JAX reference ----------------------------

def im2col(emb, window):
    B, S, E = emb.shape
    L = S - window + 1
    win = jnp.stack([emb[:, t:t + window, :] for t in range(L)], axis=1)    # (B, L, W, E)
    return win.reshape(B, L, window * E)


def reference(x1, x2, params, window):
    """Pure-JAX reference mirroring the PyTorch forward."""
    def branch(x, wc, bc, wf, bf):
        e = jnp.take(params['embedding'], x, axis=0)
        win = im2col(e, window)
        fm = jnp.einsum('blk,kc->blc', win, wc) + bc
        fm = jnp.maximum(fm, 0.0)
        pooled = jnp.max(fm, axis=1)
        return pooled @ wf.T + bf                                           # Linear(C, 1)
    o1 = branch(x1, params['wc1'], params['bc1'], params['wf1'], params['bf1'])
    o2 = branch(x2, params['wc2'], params['bc2'], params['wf2'], params['bf2'])
    feat = jnp.concatenate([o1, o2, o1 * o2, o1 - o2], axis=1)
    h = jnp.maximum(feat @ params['wh1'] + params['bh1'], 0.0)
    return h @ params['wh2'] + params['bh2']


if __name__ == "__main__":
    # vocab_size=50, embedding_dim=32, out_channels=16, window_size=3,
    # output_dim=3, HIDDEN_DIM=32, batch=2, seq=8
    B, S = 2, 8
    V, E = 50, 32
    C, W = 16, 3
    H, O = 32, 3

    key = jax.random.PRNGKey(0)
    ks = jax.random.split(key, 12)
    emb = jax.random.normal(ks[0], (V, E), jnp.float32) * 0.1
    emb = emb.at[0].set(0.0)                         # padding_idx=0

    params = dict(
        embedding=emb,
        # cnn_net1: conv weight (C,1,W,E) flattened to (W*E, C); fc weight (1, C)
        wc1=jax.random.normal(ks[1], (W * E, C), jnp.float32) * 0.1,
        bc1=jax.random.normal(ks[2], (1, C), jnp.float32) * 0.1,
        wf1=jax.random.normal(ks[3], (1, C), jnp.float32) * 0.1,
        bf1=jax.random.normal(ks[4], (1, 1), jnp.float32) * 0.1,
        # cnn_net2
        wc2=jax.random.normal(ks[5], (W * E, C), jnp.float32) * 0.1,
        bc2=jax.random.normal(ks[6], (1, C), jnp.float32) * 0.1,
        wf2=jax.random.normal(ks[7], (1, C), jnp.float32) * 0.1,
        bf2=jax.random.normal(ks[8], (1, 1), jnp.float32) * 0.1,
        # head: fc1 (4 -> H) stored transposed, fc2 (H -> O) stored transposed
        wh1=jax.random.normal(ks[9], (4, H), jnp.float32) * 0.1,
        bh1=jnp.zeros((1, H), jnp.float32),
        wh2=jax.random.normal(ks[10], (H, O), jnp.float32) * 0.1,
        bh2=jnp.zeros((1, O), jnp.float32),
    )

    x1 = jax.random.randint(ks[11], (B, S), 0, V, jnp.int32)
    x2 = jax.random.randint(jax.random.fold_in(key, 99), (B, S), 0, V, jnp.int32)

    out = cnn_nli_forward(x1, x2, params, W)
    jax.block_until_ready(out)

    ref = reference(x1, x2, params, W)
    assert out.shape == (B, O)
    assert jnp.allclose(out, ref, atol=1e-4, rtol=1e-4), (out, ref)
    print("KERNEL_OK")
</pallas_src>

<mosaic_0001>
module attributes {stable_mosaic.version = 11 : i64} {
  func.func @kernel(%arg0: i32, %arg1: memref<1x32x1xi32, #tpu.memory_space<vmem>>, %arg2: memref<50x96xf32, #tpu.memory_space<vmem>>, %arg3: memref<1x32xf32, #tpu.memory_space<vmem>>, %arg4: memref<1x32xf32, #tpu.memory_space<vmem>>, %arg5: memref<1x1xf32, #tpu.memory_space<vmem>>, %arg6: memref<1x1xf32, #tpu.memory_space<vmem>>, %arg7: memref<4x32xf32, #tpu.memory_space<vmem>>, %arg8: memref<1x32xf32, #tpu.memory_space<vmem>>, %arg9: memref<32x3xf32, #tpu.memory_space<vmem>>, %arg10: memref<1x3xf32, #tpu.memory_space<vmem>>, %arg11: memref<2x3xf32, #tpu.memory_space<vmem>>) attributes {dimension_semantics = [#tpu.dimension_semantics<parallel>], iteration_bounds = array<i64: 1>, scalar_prefetch = 0 : i64, scratch_operands = 0 : i64, tpu.core_type = #tpu.core_type<tc>, window_params = [{transform_indices = @transform_0, window_bounds = array<i64: 1, 32, 1>}, {pipeline_mode = #tpu.pipeline_mode<synchronous>, transform_indices = @transform_1, window_bounds = array<i64: 50, 96>}, {pipeline_mode = #tpu.pipeline_mode<synchronous>, transform_indices = @transform_2, window_bounds = array<i64: 1, 32>}, {pipeline_mode = #tpu.pipeline_mode<synchronous>, transform_indices = @transform_3, window_bounds = array<i64: 1, 32>}, {pipeline_mode = #tpu.pipeline_mode<synchronous>, transform_indices = @transform_4, window_bounds = array<i64: 1, 1>}, {pipeline_mode = #tpu.pipeline_mode<synchronous>, transform_indices = @transform_5, window_bounds = array<i64: 1, 1>}, {pipeline_mode = #tpu.pipeline_mode<synchronous>, transform_indices = @transform_6, window_bounds = array<i64: 4, 32>}, {pipeline_mode = #tpu.pipeline_mode<synchronous>, transform_indices = @transform_7, window_bounds = array<i64: 1, 32>}, {pipeline_mode = #tpu.pipeline_mode<synchronous>, transform_indices = @transform_8, window_bounds = array<i64: 32, 3>}, {pipeline_mode = #tpu.pipeline_mode<synchronous>, transform_indices = @transform_9, window_bounds = array<i64: 1, 3>}, {transform_indices = @transform_10, window_bounds = array<i64: 2, 3>}]} {
    %c0 = arith.constant 0 : index
    %c0_0 = arith.constant 0 : index
    %c0_1 = arith.constant 0 : index
    %0 = vector.load %arg1[%c0, %c0_0, %c0_1] : memref<1x32x1xi32, #tpu.memory_space<vmem>>, vector<1x32x1xi32>
    %1 = vector.shape_cast %0 : vector<1x32x1xi32> to vector<32x1xi32>
    %2 = tpu.iota {dimensions = array<i32: 1>} : vector<32x50xi32>
    %3 = vector.broadcast %1 : vector<32x1xi32> to vector<32x50xi32>
    %4 = arith.cmpi eq, %2, %3 : vector<32x50xi32>
    %5 = arith.extui %4 : vector<32x50xi1> to vector<32x50xi32>
    %6 = arith.sitofp %5 : vector<32x50xi32> to vector<32x50xf32>
    %c0_2 = arith.constant 0 : index
    %c0_3 = arith.constant 0 : index
    %7 = vector.load %arg2[%c0_2, %c0_3] : memref<50x96xf32, #tpu.memory_space<vmem>>, vector<50x96xf32>
    %cst = arith.constant dense<0.000000e+00> : vector<32x96xf32>
    %8 = tpu.matmul %6, %7, %cst {dimension_numbers = #tpu.dot_dimension_numbers<[1], [0], [0], [1], [0, 0, 1, 1], [], []>} : vector<32x50xf32>, vector<50x96xf32>, vector<32x96xf32> -> vector<32x96xf32>
    %9 = vector.shape_cast %8 : vector<32x96xf32> to vector<4x8x96xf32>
    %10 = vector.extract_strided_slice %9 {offsets = [0, 0, 0], sizes = [4, 6, 32], strides = [1, 1, 1]} : vector<4x8x96xf32> to vector<4x6x32xf32>
    %11 = vector.extract_strided_slice %9 {offsets = [0, 1, 32], sizes = [4, 6, 32], strides = [1, 1, 1]} : vector<4x8x96xf32> to vector<4x6x32xf32>
    %12 = arith.addf %10, %11 : vector<4x6x32xf32>
    %13 = vector.extract_strided_slice %9 {offsets = [0, 2, 64], sizes = [4, 6, 32], strides = [1, 1, 1]} : vector<4x8x96xf32> to vector<4x6x32xf32>
    %14 = arith.addf %12, %13 : vector<4x6x32xf32>
    %cst_4 = arith.constant dense<0xFF800000> : vector<4x32xf32>
    %15 = vector.multi_reduction <maximumf>, %14, %cst_4 [1] : vector<4x6x32xf32> to vector<4x32xf32>
    %c0_5 = arith.constant 0 : index
    %c0_6 = arith.constant 0 : index
    %16 = vector.load %arg3[%c0_5, %c0_6] : memref<1x32xf32, #tpu.memory_space<vmem>>, vector<1x32xf32>
    %17 = vector.broadcast %16 : vector<1x32xf32> to vector<4x32xf32>
    %18 = arith.addf %15, %17 : vector<4x32xf32>
    %cst_7 = arith.constant 0.000000e+00 : f32
    %19 = vector.broadcast %cst_7 : f32 to vector<4x32xf32>
    %20 = arith.maximumf %18, %19 : vector<4x32xf32>
    %21 = tpu.iota {dimensions = array<i32: 0>} : vector<4x32xi32>
    %22 = tpu.iota {dimensions = array<i32: 1>} : vector<4x32xi32>
    %c2_i32 = arith.constant 2 : i32
    %23 = vector.broadcast %c2_i32 : i32 to vector<4x32xi32>
    %24 = arith.cmpi slt, %21, %23 : vector<4x32xi32>
    %c16_i32 = arith.constant 16 : i32
    %25 = vector.broadcast %c16_i32 : i32 to vector<4x32xi32>
    %26 = arith.cmpi slt, %22, %25 : vector<4x32xi32>
    %27 = arith.xori %24, %26 : vector<4x32xi1>
    %cst_8 = arith.constant dense<true> : vector<4x32xi1>
    %28 = arith.xori %27, %cst_8 : vector<4x32xi1>
    %c0_9 = arith.constant 0 : index
    %c0_10 = arith.constant 0 : index
    %29 = vector.load %arg4[%c0_9, %c0_10] : memref<1x32xf32, #tpu.memory_space<vmem>>, vector<1x32xf32>
    %30 = vector.broadcast %29 : vector<1x32xf32> to vector<4x32xf32>
    %31 = arith.mulf %20, %30 : vector<4x32xf32>
    %cst_11 = arith.constant 0.000000e+00 : f32
    %32 = vector.broadcast %cst_11 : f32 to vector<4x32xf32>
    %33 = arith.select %28, %31, %32 : vector<4x32xi1>, vector<4x32xf32>
    %cst_12 = arith.constant dense<0.000000e+00> : vector<4xf32>
    %34 = vector.multi_reduction <add>, %33, %cst_12 [1] : vector<4x32xf32> to vector<4xf32>
    %35 = vector.shape_cast %34 : vector<4xf32> to vector<4x1xf32>
    %36 = vector.extract_strided_slice %35 {offsets = [0, 0], sizes = [2, 1], strides = [1, 1]} : vector<4x1xf32> to vector<2x1xf32>
    %c0_13 = arith.constant 0 : index
    %c0_14 = arith.constant 0 : index
    %37 = vector.load %arg5[%c0_13, %c0_14] : memref<1x1xf32, #tpu.memory_space<vmem>>, vector<1x1xf32>
    %38 = vector.broadcast %37 : vector<1x1xf32> to vector<2x1xf32>
    %39 = arith.addf %36, %38 : vector<2x1xf32>
    %40 = vector.extract_strided_slice %35 {offsets = [2, 0], sizes = [2, 1], strides = [1, 1]} : vector<4x1xf32> to vector<2x1xf32>
    %c0_15 = arith.constant 0 : index
    %c0_16 = arith.constant 0 : index
    %41 = vector.load %arg6[%c0_15, %c0_16] : memref<1x1xf32, #tpu.memory_space<vmem>>, vector<1x1xf32>
    %42 = vector.broadcast %41 : vector<1x1xf32> to vector<2x1xf32>
    %43 = arith.addf %40, %42 : vector<2x1xf32>
    %c0_17 = arith.constant 0 : index
    %c0_18 = arith.constant 0 : index
    %44 = vector.load %arg7[%c0_17, %c0_18] : memref<4x32xf32, #tpu.memory_space<vmem>>, vector<4x32xf32>
    %45 = vector.extract_strided_slice %44 {offsets = [0, 0], sizes = [1, 32], strides = [1, 1]} : vector<4x32xf32> to vector<1x32xf32>
    %46 = vector.broadcast %39 : vector<2x1xf32> to vector<2x32xf32>
    %47 = vector.broadcast %45 : vector<1x32xf32> to vector<2x32xf32>
    %48 = arith.mulf %46, %47 : vector<2x32xf32>
    %49 = vector.extract_strided_slice %44 {offsets = [1, 0], sizes = [1, 32], strides = [1, 1]} : vector<4x32xf32> to vector<1x32xf32>
    %50 = vector.broadcast %43 : vector<2x1xf32> to vector<2x32xf32>
    %51 = vector.broadcast %49 : vector<1x32xf32> to vector<2x32xf32>
    %52 = arith.mulf %50, %51 : vector<2x32xf32>
    %53 = arith.addf %48, %52 : vector<2x32xf32>
    %54 = arith.mulf %39, %43 : vector<2x1xf32>
    %55 = vector.extract_strided_slice %44 {offsets = [2, 0], sizes = [1, 32], strides = [1, 1]} : vector<4x32xf32> to vector<1x32xf32>
    %56 = vector.broadcast %54 : vector<2x1xf32> to vector<2x32xf32>
    %57 = vector.broadcast %55 : vector<1x32xf32> to vector<2x32xf32>
    %58 = arith.mulf %56, %57 : vector<2x32xf32>
    %59 = arith.addf %53, %58 : vector<2x32xf32>
    %60 = arith.subf %39, %43 : vector<2x1xf32>
    %61 = vector.extract_strided_slice %44 {offsets = [3, 0], sizes = [1, 32], strides = [1, 1]} : vector<4x32xf32> to vector<1x32xf32>
    %62 = vector.broadcast %60 : vector<2x1xf32> to vector<2x32xf32>
    %63 = vector.broadcast %61 : vector<1x32xf32> to vector<2x32xf32>
    %64 = arith.mulf %62, %63 : vector<2x32xf32>
    %65 = arith.addf %59, %64 : vector<2x32xf32>
    %c0_19 = arith.constant 0 : index
    %c0_20 = arith.constant 0 : index
    %66 = vector.load %arg8[%c0_19, %c0_20] : memref<1x32xf32, #tpu.memory_space<vmem>>, vector<1x32xf32>
    %67 = vector.broadcast %66 : vector<1x32xf32> to vector<2x32xf32>
    %68 = arith.addf %65, %67 : vector<2x32xf32>
    %cst_21 = arith.constant 0.000000e+00 : f32
    %69 = vector.broadcast %cst_21 : f32 to vector<2x32xf32>
    %70 = arith.maximumf %68, %69 : vector<2x32xf32>
    %c0_22 = arith.constant 0 : index
    %c0_23 = arith.constant 0 : index
    %71 = vector.load %arg9[%c0_22, %c0_23] : memref<32x3xf32, #tpu.memory_space<vmem>>, vector<32x3xf32>
    %cst_24 = arith.constant dense<0.000000e+00> : vector<2x3xf32>
    %72 = tpu.matmul %70, %71, %cst_24 {dimension_numbers = #tpu.dot_dimension_numbers<[1], [0], [0], [1], [0, 0, 1, 1], [], []>} : vector<2x32xf32>, vector<32x3xf32>, vector<2x3xf32> -> vector<2x3xf32>
    %c0_25 = arith.constant 0 : index
    %c0_26 = arith.constant 0 : index
    %73 = vector.load %arg10[%c0_25, %c0_26] : memref<1x3xf32, #tpu.memory_space<vmem>>, vector<1x3xf32>
    %74 = vector.broadcast %73 : vector<1x3xf32> to vector<2x3xf32>
    %75 = arith.addf %72, %74 : vector<2x3xf32>
    %c0_27 = arith.constant 0 : index
    %c0_28 = arith.constant 0 : index
    %76 = vector.load %arg11[%c0_27, %c0_28] : memref<2x3xf32, #tpu.memory_space<vmem>>, vector<2x3xf32>
    tpu.vector_store %arg11[%c0_27, %c0_28], %75 {strides = array<i32>} : memref<2x3xf32, #tpu.memory_space<vmem>>, vector<2x3xf32>,
    return
  }
  func.func @transform_0(%arg0: i32) -> (i32, i32, i32) {
    %c0_i32 = arith.constant 0 : i32
    %c0_i32_0 = arith.constant 0 : i32
    %c0_i32_1 = arith.constant 0 : i32
    return %arg0, %c0_i32, %c0_i32_0 : i32, i32, i32
  }
  func.func @transform_1(%arg0: i32) -> (i32, i32) {
    %c0_i32 = arith.constant 0 : i32
    %c0_i32_0 = arith.constant 0 : i32
    %c0_i32_1 = arith.constant 0 : i32
    return %c0_i32, %c0_i32_0 : i32, i32
  }
  func.func @transform_2(%arg0: i32) -> (i32, i32) {
    %c0_i32 = arith.constant 0 : i32
    %c0_i32_0 = arith.constant 0 : i32
    %c0_i32_1 = arith.constant 0 : i32
    return %c0_i32, %c0_i32_0 : i32, i32
  }
  func.func @transform_3(%arg0: i32) -> (i32, i32) {
    %c0_i32 = arith.constant 0 : i32
    %c0_i32_0 = arith.constant 0 : i32
    %c0_i32_1 = arith.constant 0 : i32
    return %c0_i32, %c0_i32_0 : i32, i32
  }
  func.func @transform_4(%arg0: i32) -> (i32, i32) {
    %c0_i32 = arith.constant 0 : i32
    %c0_i32_0 = arith.constant 0 : i32
    %c0_i32_1 = arith.constant 0 : i32
    return %c0_i32, %c0_i32_0 : i32, i32
  }
  func.func @transform_5(%arg0: i32) -> (i32, i32) {
    %c0_i32 = arith.constant 0 : i32
    %c0_i32_0 = arith.constant 0 : i32
    %c0_i32_1 = arith.constant 0 : i32
    return %c0_i32, %c0_i32_0 : i32, i32
  }
  func.func @transform_6(%arg0: i32) -> (i32, i32) {
    %c0_i32 = arith.constant 0 : i32
    %c0_i32_0 = arith.constant 0 : i32
    %c0_i32_1 = arith.constant 0 : i32
    return %c0_i32, %c0_i32_0 : i32, i32
  }
  func.func @transform_7(%arg0: i32) -> (i32, i32) {
    %c0_i32 = arith.constant 0 : i32
    %c0_i32_0 = arith.constant 0 : i32
    %c0_i32_1 = arith.constant 0 : i32
    return %c0_i32, %c0_i32_0 : i32, i32
  }
  func.func @transform_8(%arg0: i32) -> (i32, i32) {
    %c0_i32 = arith.constant 0 : i32
    %c0_i32_0 = arith.constant 0 : i32
    %c0_i32_1 = arith.constant 0 : i32
    return %c0_i32, %c0_i32_0 : i32, i32
  }
  func.func @transform_9(%arg0: i32) -> (i32, i32) {
    %c0_i32 = arith.constant 0 : i32
    %c0_i32_0 = arith.constant 0 : i32
    %c0_i32_1 = arith.constant 0 : i32
    return %c0_i32, %c0_i32_0 : i32, i32
  }
  func.func @transform_10(%arg0: i32) -> (i32, i32) {
    %c0_i32 = arith.constant 0 : i32
    %c0_i32_0 = arith.constant 0 : i32
    return %arg0, %c0_i32 : i32, i32
  }
}

</mosaic_0001>

<llo_original>
// kernel: tpu_custom_call.1
$region0: #{tpu_custom_call.1}
  #allocation0 [shape = 'u32[]', space=smem, size = 0x4, offset = 0x4, fixed_abs, tag = 'smem constant byte address 0x4 - core index']
  #allocation1 [shape = 'u32[144,128]{1,0:T(1,128)}', space=vmem, size = 0x12000, scoped, tag = 'internal scratch']
  #allocation2 [shape = 'f32[1,1]{1,0:T(1,128)S(1)}', space=vmem, size = 0x200, scoped, tag = 'scoped memory for tpu_custom_call.1']
  #allocation3 [shape = 'f32[1,1]{1,0:T(1,128)S(1)}', space=vmem, size = 0x200, scoped, tag = 'scoped memory for tpu_custom_call.1']
  %s0 = inlined_call_operand.vmem [shape: s32[1,32,1], index: 0, kind: input, shape index: {}]
  %s1 = inlined_call_operand.vmem [shape: f32[50,96], index: 1, kind: input, shape index: {}]
  %s2 = inlined_call_operand.vmem [shape: f32[1,32], index: 2, kind: input, shape index: {}]
  %s3 = inlined_call_operand.vmem [shape: f32[1,32], index: 3, kind: input, shape index: {}]
  %s4 = inlined_call_operand.<no memory space> [shape: f32[1,1], index: 4, kind: input, shape index: {}]
  %s5 = inlined_call_operand.<no memory space> [shape: f32[1,1], index: 5, kind: input, shape index: {}]
  %s6 = inlined_call_operand.vmem [shape: f32[4,32], index: 6, kind: input, shape index: {}]
  %s7 = inlined_call_operand.vmem [shape: f32[1,32], index: 7, kind: input, shape index: {}]
  %s8 = inlined_call_operand.vmem [shape: f32[32,3], index: 8, kind: input, shape index: {}]
  %s9 = inlined_call_operand.vmem [shape: f32[1,3], index: 9, kind: input, shape index: {}]
  %s10 = inlined_call_operand.hbm [shape: f32[2,3], index: 10, kind: output, shape index: {}]
  %s11 = sld [smem:[#allocation0]]
  $region50: #{tpu_custom_call.1} parent=0
    _
  %s13 = ssub.s32 1, %s11
  %s14 = scalar_select 0, %s13, %s11
  %v15 = vstv %s4
  %16 = vst [vmem:[#allocation2] sm:$0x1] %v15
  %v17 = vstv %s5
  %18 = vst [vmem:[#allocation3] sm:$0x1] %v17
  $region1: #{tpu_custom_call.1} parent=0
    #allocation4 [shape = 'u8[1024]{0}', space=vmem, size = 0x400, scoped, tag = 'output window, operand 0, single buffered']
    #allocation5 [shape = 's32[1]{0}', space=sflag, size = 0x4, scoped, tag = 'scoped memory for tpu_custom_call.1']
    %19 = vsyncpa [#allocation5], 0
    // Predicated region
    $region2: #{tpu_custom_call.1} parent=1 // pred_check
      _
    $region3: #{tpu_custom_call.1} parent=1 // pred_check_branch
      %21 = sbr.rel (0) target = $region5
    $region4: #{tpu_custom_call.1} parent=1 // pred_region
      _
    $region5: #{tpu_custom_call.1} parent=1 // pred_fallthru
      _
    // Predicated region
    $region6: #{tpu_custom_call.1} parent=1 // pred_check
      _
    $region7: #{tpu_custom_call.1} parent=1 // pred_check_branch
      %23 = sbr.rel (0) target = $region9
    $region8: #{tpu_custom_call.1} parent=1 // pred_region
      _
    $region9: #{tpu_custom_call.1} parent=1 // pred_fallthru
      _
    // Predicated region
    $region10: #{tpu_custom_call.1} parent=1 // pred_check
      _
    $region11: #{tpu_custom_call.1} parent=1 // pred_check_branch
      %25 = sbr.rel (0) target = $region13
    $region12: #{tpu_custom_call.1} parent=1 // pred_region
      _
    $region13: #{tpu_custom_call.1} parent=1 // pred_fallthru
      _
    // Predicated region
    $region14: #{tpu_custom_call.1} parent=1 // pred_check
      _
    $region15: #{tpu_custom_call.1} parent=1 // pred_check_branch
      %27 = sbr.rel (0) target = $region17
    $region16: #{tpu_custom_call.1} parent=1 // pred_region
      _
    $region17: #{tpu_custom_call.1} parent=1 // pred_fallthru
      _
    // Predicated region
    $region18: #{tpu_custom_call.1} parent=1 // pred_check
      _
    $region19: #{tpu_custom_call.1} parent=1 // pred_check_branch
      %29 = sbr.rel (0) target = $region21
    $region20: #{tpu_custom_call.1} parent=1 // pred_region
      _
    $region21: #{tpu_custom_call.1} parent=1 // pred_fallthru
      _
    // Predicated region
    $region22: #{tpu_custom_call.1} parent=1 // pred_check
      _
    $region23: #{tpu_custom_call.1} parent=1 // pred_check_branch
      %31 = sbr.rel (0) target = $region25
    $region24: #{tpu_custom_call.1} parent=1 // pred_region
      _
    $region25: #{tpu_custom_call.1} parent=1 // pred_fallthru
      _
    // Predicated region
    $region26: #{tpu_custom_call.1} parent=1 // pred_check
      _
    $region27: #{tpu_custom_call.1} parent=1 // pred_check_branch
      %33 = sbr.rel (0) target = $region29
    $region28: #{tpu_custom_call.1} parent=1 // pred_region
      _
    $region29: #{tpu_custom_call.1} parent=1 // pred_fallthru
      _
    // Predicated region
    $region30: #{tpu_custom_call.1} parent=1 // pred_check
      _
    $region31: #{tpu_custom_call.1} parent=1 // pred_check_branch
      %35 = sbr.rel (0) target = $region33
    $region32: #{tpu_custom_call.1} parent=1 // pred_region
      _
    $region33: #{tpu_custom_call.1} parent=1 // pred_fallthru
      _
    // Predicated region
    $region34: #{tpu_custom_call.1} parent=1 // pred_check
      _
    $region35: #{tpu_custom_call.1} parent=1 // pred_check_branch
      %37 = sbr.rel (0) target = $region37
    $region36: #{tpu_custom_call.1} parent=1 // pred_region
      _
    $region37: #{tpu_custom_call.1} parent=1 // pred_fallthru
      _
    // Predicated region
    $region38: #{tpu_custom_call.1} parent=1 // pred_check
      _
    $region39: #{tpu_custom_call.1} parent=1 // pred_check_branch
      %39 = sbr.rel (0) target = $region41
    $region40: #{tpu_custom_call.1} parent=1 // pred_region
      _
    $region41: #{tpu_custom_call.1} parent=1 // pred_fallthru
      _
    %v40 = vld [vmem:[%s0] sm:$0xff]
    %v41 = vld [vmem:[%s0 + $0x8] sm:$0xff]
    %v42 = vld [vmem:[%s0 + $0x10] sm:$0xff]
    %v43 = vld [vmem:[%s0 + $0x18] sm:$0xff]
    %v44 = vlaneseq
    %v45 = vand.u32 %v44, 127
    %46 = vset.pattern.permute.xlu0 0
    %47 = vperm.xlu0 %46, %v40
    %v48 = vpop.permute.xlu0 %47
    %49 = vset.pattern.permute.xlu0 0
    %50 = vperm.xlu0 %49, %v41
    %v51 = vpop.permute.xlu0 %50
    %52 = vset.pattern.permute.xlu0 0
    %53 = vperm.xlu0 %52, %v42
    %v54 = vpop.permute.xlu0 %53
    %55 = vset.pattern.permute.xlu0 0
    %56 = vperm.xlu0 %55, %v43
    %v57 = vpop.permute.xlu0 %56
    %vm58 = vcmp.eq.s32.totalorder %v45, %v48
    %vm59 = vcmp.eq.s32.totalorder %v45, %v51
    %vm60 = vcmp.eq.s32.totalorder %v45, %v54
    %vm61 = vcmp.eq.s32.totalorder %v45, %v57
    %v62 = vsel %vm58, 1, 0
    %v63 = vsel %vm59, 1, 0
    %v64 = vsel %vm60, 1, 0
    %v65 = vsel %vm61, 1, 0
    %v66 = vcvt.s32.f32 %v62
    %v67 = vcvt.s32.f32 %v63
    %v68 = vcvt.s32.f32 %v64
    %v69 = vcvt.s32.f32 %v65
    %v70 = vld [vmem:[%s1] sm:$0xff]
    %v71 = vld [vmem:[%s1 + $0x8] sm:$0xff]
    %v72 = vld [vmem:[%s1 + $0x10] sm:$0xff]
    %v73 = vld [vmem:[%s1 + $0x18] sm:$0xff]
    %v74 = vld [vmem:[%s1 + $0x20] sm:$0xff]
    %v75 = vld [vmem:[%s1 + $0x28] sm:$0xff]
    %v76 = vld [vmem:[%s1 + $0x30] sm:$0x3]
    %vm77 = vcmask 408576
    %v79 = vsel %vm77, %v66, 0
    %v82 = vsel %vm77, %v67, 0
    %v85 = vsel %vm77, %v68, 0
    %v88 = vsel %vm77, %v69, 0
    %vm90 = vcmask 1041408
    %v92 = vsel %vm90, %v76, 0
    %94 = vmatprep.subr.mxu0 0.0
    %95 = vmatpush1.msra.mxu0 0.0
    %96 = vmatprep.subr.mxu0 0.0
    %97 = vmatpush1.msra.mxu0 0.0
    %98 = vmatprep.subr.mxu0 0.0
    %99 = vmatpush1.msra.mxu0 0.0
    %100 = vmatprep.subr.mxu0 0.0
    %101 = vmatpush1.msra.mxu0 0.0
    %102 = vmatprep.subr.mxu0 0.0
    %103 = vmatpush1.msra.mxu0 0.0
    %104 = vmatprep.subr.mxu0 0.0
    %105 = vmatpush1.msra.mxu0 0.0
    %106 = vmatprep.subr.mxu0 0.0
    %107 = vmatpush1.msra.mxu0 0.0
    %108 = vmatprep.subr.mxu0 0.0
    %109 = vmatpush1.msra.mxu0 0.0
    %110 = vmatprep.subr.mxu0 0.0
    %111 = vmatpush1.msra.mxu0 0.0
    %112 = vmatprep.subr.mxu0 0.0
    %113 = vmatpush1.msra.mxu0 %v92
    %114 = vmatprep.subr.mxu0 0.0
    %115 = vmatpush1.msra.mxu0 %v75
    %116 = vmatprep.subr.mxu0 0.0
    %117 = vmatpush1.msra.mxu0 %v74
    %118 = vmatprep.subr.mxu0 0.0
    %119 = vmatpush1.msra.mxu0 %v73
    %120 = vmatprep.subr.mxu0 0.0
    %121 = vmatpush1.msra.mxu0 %v72
    %122 = vmatprep.subr.mxu0 0.0
    %123 = vmatpush1.msra.mxu0 %v71
    %124 = vmatprep.subr.mxu0 0.0
    %125 = vmatpush1.msra.mxu0 %v70
    %126 = vmatprep.subr.mxu0 0.0
    %127 = vmatpush2.msra.mxu0 0.0
    %128 = vmatprep.subr.mxu0 0.0
    %129 = vmatpush2.msra.mxu0 0.0
    %130 = vmatprep.subr.mxu0 0.0
    %131 = vmatpush2.msra.mxu0 0.0
    %132 = vmatprep.subr.mxu0 0.0
    %133 = vmatpush2.msra.mxu0 0.0
    %134 = vmatprep.subr.mxu0 0.0
    %135 = vmatpush2.msra.mxu0 0.0
    %136 = vmatprep.subr.mxu0 0.0
    %137 = vmatpush2.msra.mxu0 0.0
    %138 = vmatprep.subr.mxu0 0.0
    %139 = vmatpush2.msra.mxu0 0.0
    %140 = vmatprep.subr.mxu0 0.0
    %141 = vmatpush2.msra.mxu0 0.0
    %142 = vmatprep.subr.mxu0 0.0
    %143 = vmatpush2.msra.mxu0 0.0
    %144 = vmatprep.subr.mxu0 0.0
    %145 = vmatpush2.msra.mxu0 0.0
    %146 = vmatprep.subr.mxu0 0.0
    %147 = vmatpush2.msra.mxu0 0.0
    %148 = vmatprep.subr.mxu0 0.0
    %149 = vmatpush2.msra.mxu0 0.0
    %150 = vmatprep.subr.mxu0 0.0
    %151 = vmatpush2.msra.mxu0 0.0
    %152 = vmatprep.subr.mxu0 0.0
    %153 = vmatpush2.msra.mxu0 0.0
    %154 = vmatprep.subr.mxu0 0.0
    %155 = vmatpush2.msra.mxu0 0.0
    %156 = vmatprep.subr.mxu0 0.0
    %157 = vmatpush2.msra.mxu0 0.0
    %158 = vmatprep.mubr.f32.mxu0 0.0
    %159 = vmatmul.mubr.f32.gmra.mxu0 %v79
    %v160 = vpop.f32.mrf.mxu0
    %v161 = vadd.f32 0.0, %v160
    %v162 = vpop.f32.mrf.mxu0
    %163 = vmatprep.mubr.f32.mxu0 0.0
    %164 = vmatmul.mubr.f32.gmra.mxu0 %v82
    %v165 = vpop.f32.mrf.mxu0
    %v166 = vadd.f32 0.0, %v165
    %v167 = vpop.f32.mrf.mxu0
    %168 = vmatprep.mubr.f32.mxu0 0.0
    %169 = vmatmul.mubr.f32.gmra.mxu0 %v85
    %v170 = vpop.f32.mrf.mxu0
    %v171 = vadd.f32 0.0, %v170
    %v172 = vpop.f32.mrf.mxu0
    %173 = vmatprep.mubr.f32.mxu0 0.0
    %174 = vmatmul.mubr.f32.gmra.mxu0 %v88
    %v175 = vpop.f32.mrf.mxu0
    %v176 = vadd.f32 0.0, %v175
    %v177 = vpop.f32.mrf.mxu0
    %178 = vdwg.mxu0
    %v183 = vrot.slane %v161, 1
    %v184 = vrot.slane %v166, 1
    %v185 = vrot.slane %v171, 1
    %v186 = vrot.slane %v176, 1
    %187 = vrot.lane.b32.xlu0 %v183, 96
    %v188 = vpop.permute.xlu0 %187
    %189 = vrot.lane.b32.xlu0 %v184, 96
    %v190 = vpop.permute.xlu0 %189
    %191 = vrot.lane.b32.xlu0 %v185, 96
    %v192 = vpop.permute.xlu0 %191
    %193 = vrot.lane.b32.xlu0 %v186, 96
    %v194 = vpop.permute.xlu0 %193
    %v199 = vadd.f32 %v161, %v188
    %v200 = vadd.f32 %v166, %v190
    %v201 = vadd.f32 %v171, %v192
    %v202 = vadd.f32 %v176, %v194
    %v203 = vrot.slane %v161, 2
    %v204 = vrot.slane %v166, 2
    %v205 = vrot.slane %v171, 2
    %v206 = vrot.slane %v176, 2
    %207 = vrot.lane.b32.xlu0 %v203, 64
    %v208 = vpop.permute.xlu0 %207
    %209 = vrot.lane.b32.xlu0 %v204, 64
    %v210 = vpop.permute.xlu0 %209
    %211 = vrot.lane.b32.xlu0 %v205, 64
    %v212 = vpop.permute.xlu0 %211
    %213 = vrot.lane.b32.xlu0 %v206, 64
    %v214 = vpop.permute.xlu0 %213
    %v219 = vadd.f32 %v199, %v208
    %v220 = vadd.f32 %v200, %v210
    %v221 = vadd.f32 %v201, %v212
    %v222 = vadd.f32 %v202, %v214
    %vm223 = vcmask 259072
    %v224 = vsel %vm223, %v219, -inf
    %v225 = vrot.slane %v224, 4
    %v226 = vmax.f32 %v224, %v225
    %v227 = vrot.slane %v226, 2
    %v228 = vmax.f32 %v226, %v227
    %v229 = vrot.slane %v228, 1
    %v230 = vmax.f32 %v228, %v229
    %v231 = vsel %vm223, %v220, -inf
    %v232 = vrot.slane %v231, 4
    %v233 = vmax.f32 %v231, %v232
    %v234 = vrot.slane %v233, 2
    %v235 = vmax.f32 %v233, %v234
    %v236 = vrot.slane %v235, 1
    %v237 = vmax.f32 %v235, %v236
    %v238 = vsel %vm223, %v221, -inf
    %v239 = vrot.slane %v238, 4
    %v240 = vmax.f32 %v238, %v239
    %v241 = vrot.slane %v240, 2
    %v242 = vmax.f32 %v240, %v241
    %v243 = vrot.slane %v242, 1
    %v244 = vmax.f32 %v242, %v243
    %v245 = vsel %vm223, %v222, -inf
    %v246 = vrot.slane %v245, 4
    %v247 = vmax.f32 %v245, %v246
    %v248 = vrot.slane %v247, 2
    %v249 = vmax.f32 %v247, %v248
    %v250 = vrot.slane %v249, 1
    %v251 = vmax.f32 %v249, %v250
    %v252 = vld [vmem:[%s2] sm:$0x1]
    %v254 = vlaneseq
    %v255 = vshrl.u32 %v254, 7
    %v256 = vsub.s32 0, %v255
    %v257 = vrot.slane %v252, %v256
    %v259 = vadd.f32 %v230, %v257
    %v260 = vadd.f32 %v237, %v257
    %v261 = vadd.f32 %v244, %v257
    %v262 = vadd.f32 %v251, %v257
    %v263 = vmax.f32 %v259, 0.0
    %v264 = vmax.f32 %v260, 0.0
    %v265 = vmax.f32 %v261, 0.0
    %v266 = vmax.f32 %v262, 0.0
    %v267 = vlaneseq
    %v268 = vshrl.u32 %v267, 7
    %vm269 = vcmp.lt.s32.totalorder %v268, 2
    %vm270 = vcmp.lt.s32.totalorder %v45, 16
    %vm271 = vmxor %vm269, %vm270
    %vm272 = vmxor %vm271, 1
    %v273 = vld [vmem:[%s3] sm:$0x1]
    %v275 = vlaneseq
    %v276 = vshrl.u32 %v275, 7
    %v277 = vsub.s32 0, %v276
    %v278 = vrot.slane %v273, %v277
    %v280 = vmul.f32 %v263, %v278
    %v281 = vmul.f32 %v264, %v278
    %v282 = vmul.f32 %v265, %v278
    %v283 = vmul.f32 %v266, %v278
    %v288 = vrot.slane %v281, 7
    %vm289 = vcmask 1041409
    %v290 = vsel %vm289, %v288, %v280
    %v291 = vrot.slane %v282, 6
    %vm292 = vcmask 1042434
    %v293 = vsel %vm292, %v291, %v290
    %v294 = vrot.slane %v283, 5
    %vm295 = vcmask 1043459
    %v296 = vsel %vm295, %v294, %v293
    %v298 = vsel %vm272, %v296, 0.0
    %vm299 = vcmask 257024
    %v300 = vsel %vm299, %v298, 0.0
    %301 = vadd.xlane.f32.xlu0 %v300
    %v302 = vpop.xlane.xlu0 %301
    %v303 = vld [vmem:[#allocation2] sm:$0x1]
    %v305 = vlaneseq
    %v306 = vshrl.u32 %v305, 7
    %v307 = vsub.s32 0, %v306
    %v308 = vrot.slane %v303, %v307
    %v310 = vadd.f32 %v302, %v308
    %v311 = vld [vmem:[#allocation3] sm:$0x1]
    %v313 = vlaneseq
    %v314 = vshrl.u32 %v313, 7
    %v315 = vsub.s32 0, %v314
    %v316 = vrot.slane %v311, %v315
    %v318 = vadd.f32 %v302, %v316
    %v319 = vld [vmem:[%s6] sm:$0xf]
    %321 = vset.pattern.permute.xlu0 0
    %322 = vperm.xlu0 %321, %v310
    %v323 = vpop.permute.xlu0 %322
    %v325 = vlaneseq
    %v326 = vshrl.u32 %v325, 7
    %v327 = vsub.s32 0, %v326
    %v328 = vrot.slane %v319, %v327
    %v329 = vmul.f32 %v323, %v328
    %331 = vset.pattern.permute.xlu0 0
    %332 = vperm.xlu0 %331, %v318
    %v333 = vpop.permute.xlu0 %332
    %v335 = vlaneseq
    %v336 = vshrl.u32 %v335, 7
    %v337 = vsub.s32 1, %v336
    %v338 = vrot.slane %v319, %v337
    %v339 = vmul.f32 %v333, %v338
    %v341 = vrot.slane %v339, 2
    %v343 = vadd.f32 %v329, %v341
    %v344 = vrot.slane %v318, 2
    %v346 = vmul.f32 %v310, %v344
    %348 = vset.pattern.permute.xlu0 0
    %349 = vperm.xlu0 %348, %v346
    %v350 = vpop.permute.xlu0 %349
    %v352 = vlaneseq
    %v353 = vshrl.u32 %v352, 7
    %v354 = vsub.s32 2, %v353
    %v355 = vrot.slane %v319, %v354
    %v356 = vmul.f32 %v350, %v355
    %v357 = vadd.f32 %v343, %v356
    %v358 = vsub.f32 %v310, %v344
    %360 = vset.pattern.permute.xlu0 0
    %361 = vperm.xlu0 %360, %v358
    %v362 = vpop.permute.xlu0 %361
    %v364 = vlaneseq
    %v365 = vshrl.u32 %v364, 7
    %v366 = vsub.s32 3, %v365
    %v367 = vrot.slane %v319, %v366
    %v368 = vmul.f32 %v362, %v367
    %v369 = vadd.f32 %v357, %v368
    %v370 = vld [vmem:[%s7] sm:$0x1]
    %v372 = vlaneseq
    %v373 = vshrl.u32 %v372, 7
    %v374 = vsub.s32 0, %v373
    %v375 = vrot.slane %v370, %v374
    %v377 = vadd.f32 %v369, %v375
    %v378 = vmax.f32 %v377, 0.0
    %v379 = vld [vmem:[%s8] sm:$0xff]
    %v380 = vld [vmem:[%s8 + $0x8] sm:$0xff]
    %v381 = vld [vmem:[%s8 + $0x10] sm:$0xff]
    %v382 = vld [vmem:[%s8 + $0x18] sm:$0xff]
    %v383 = vld [vmem:[%s9] sm:$0x1]
    %v385 = vlaneseq
    %v386 = vshrl.u32 %v385, 7
    %v387 = vsub.s32 0, %v386
    %v388 = vrot.slane %v383, %v387
    %vm390 = vcmask 261120
    %v392 = vsel %vm390, %v378, 0
    %394 = vmatprep.subr.mxu0 0.0
    %395 = vmatpush1.msra.mxu0 0.0
    %396 = vmatprep.subr.mxu0 0.0
    %397 = vmatpush1.msra.mxu0 0.0
    %398 = vmatprep.subr.mxu0 0.0
    %399 = vmatpush1.msra.mxu0 0.0
    %400 = vmatprep.subr.mxu0 0.0
    %401 = vmatpush1.msra.mxu0 0.0
    %402 = vmatprep.subr.mxu0 0.0
    %403 = vmatpush1.msra.mxu0 0.0
    %404 = vmatprep.subr.mxu0 0.0
    %405 = vmatpush1.msra.mxu0 0.0
    %406 = vmatprep.subr.mxu0 0.0
    %407 = vmatpush1.msra.mxu0 0.0
    %408 = vmatprep.subr.mxu0 0.0
    %409 = vmatpush1.msra.mxu0 0.0
    %410 = vmatprep.subr.mxu0 0.0
    %411 = vmatpush1.msra.mxu0 0.0
    %412 = vmatprep.subr.mxu0 0.0
    %413 = vmatpush1.msra.mxu0 0.0
    %414 = vmatprep.subr.mxu0 0.0
    %415 = vmatpush1.msra.mxu0 0.0
    %416 = vmatprep.subr.mxu0 0.0
    %417 = vmatpush1.msra.mxu0 0.0
    %418 = vmatprep.subr.mxu0 0.0
    %419 = vmatpush1.msra.mxu0 %v382
    %420 = vmatprep.subr.mxu0 0.0
    %421 = vmatpush1.msra.mxu0 %v381
    %422 = vmatprep.subr.mxu0 0.0
    %423 = vmatpush1.msra.mxu0 %v380
    %424 = vmatprep.subr.mxu0 0.0
    %425 = vmatpush1.msra.mxu0 %v379
    %426 = vmatprep.subr.mxu0 0.0
    %427 = vmatpush2.msra.mxu0 0.0
    %428 = vmatprep.subr.mxu0 0.0
    %429 = vmatpush2.msra.mxu0 0.0
    %430 = vmatprep.subr.mxu0 0.0
    %431 = vmatpush2.msra.mxu0 0.0
    %432 = vmatprep.subr.mxu0 0.0
    %433 = vmatpush2.msra.mxu0 0.0
    %434 = vmatprep.subr.mxu0 0.0
    %435 = vmatpush2.msra.mxu0 0.0
    %436 = vmatprep.subr.mxu0 0.0
    %437 = vmatpush2.msra.mxu0 0.0
    %438 = vmatprep.subr.mxu0 0.0
    %439 = vmatpush2.msra.mxu0 0.0
    %440 = vmatprep.subr.mxu0 0.0
    %441 = vmatpush2.msra.mxu0 0.0
    %442 = vmatprep.subr.mxu0 0.0
    %443 = vmatpush2.msra.mxu0 0.0
    %444 = vmatprep.subr.mxu0 0.0
    %445 = vmatpush2.msra.mxu0 0.0
    %446 = vmatprep.subr.mxu0 0.0
    %447 = vmatpush2.msra.mxu0 0.0
    %448 = vmatprep.subr.mxu0 0.0
    %449 = vmatpush2.msra.mxu0 0.0
    %450 = vmatprep.subr.mxu0 0.0
    %451 = vmatpush2.msra.mxu0 0.0
    %452 = vmatprep.subr.mxu0 0.0
    %453 = vmatpush2.msra.mxu0 0.0
    %454 = vmatprep.subr.mxu0 0.0
    %455 = vmatpush2.msra.mxu0 0.0
    %456 = vmatprep.subr.mxu0 0.0
    %457 = vmatpush2.msra.mxu0 0.0
    %458 = vmatprep.mubr.f32.mxu0 0.0
    %459 = vmatmul.mubr.f32.gmra.mxu0 %v392
    %v460 = vpop.f32.mrf.mxu0
    %v461 = vadd.f32 %v388, %v460
    %v462 = vpop.f32.mrf.mxu0
    %463 = vdwg.mxu0
    %vm464 = vcmask 17408
    %465 = vst.msk [vmem:[#allocation4] sm:$0x3] %vm464, %v461
    // Predicated region
    $region42: #{tpu_custom_call.1} parent=1 // pred_check
      _
    $region43: #{tpu_custom_call.1} parent=1 // pred_check_branch
      %467 = sbr.rel (0) target = $region45
    $region44: #{tpu_custom_call.1} parent=1 // pred_region
      %s469 = ssub.s32 32, 32
      %470 = vsyncadd [#allocation5], %s469
      %s472 = sshll.u32 [#allocation4], 4
      %s473 = int_to_ptr.vmem [resolvable:$true] %s472
      %475 = dma.vmem_to_hbm [thread:$0]  %s473, 32, %s10, [#allocation5]
    $region45: #{tpu_custom_call.1} parent=1 // pred_fallthru
      _
    // Predicated region
    $region46: #{tpu_custom_call.1} parent=1 // pred_check
      _
    $region47: #{tpu_custom_call.1} parent=1 // pred_check_branch
      %477 = sbr.rel (0) target = $region49
    $region48: #{tpu_custom_call.1} parent=1 // pred_region
      %478 = dma.done [#allocation5], 32
    $region49: #{tpu_custom_call.1} parent=1 // pred_fallthru
      _
    %479 = vsyncpa [#allocation5], 1

</llo_original>
